<compile_context>
chip_gen: v7x
topology: tpu7x:2x2x1
jax: 0.10.0
libtpu: 0.0.40
codegen_flags: <defaults>
</compile_context>

<pallas_src>
import functools

import jax
import jax.numpy as jnp
from jax.experimental import pallas as pl
from jax.experimental.pallas import tpu as pltpu

BN_EPS = 1e-5
_W_HALO = 8   # right-side W padding: one full sublane tile of zeros (conv halo)


# --------------------------- roll-direction probe -----------------------------

_ROLL_SIGN = None


def _roll_sign():
    """Pin pltpu.roll's sign convention (np.roll-like vs. the opposite) once."""
    global _ROLL_SIGN
    if _ROLL_SIGN is None:
        def probe(x_ref, o_ref):
            o_ref[...] = pltpu.roll(x_ref[...], 1, axis=0)

        x = jax.lax.broadcasted_iota(jnp.float32, (8, 128), 0)
        out = pl.pallas_call(
            probe,
            out_shape=jax.ShapeDtypeStruct((8, 128), jnp.float32),
            in_specs=[pl.BlockSpec(memory_space=pltpu.MemorySpace.VMEM)],
            out_specs=pl.BlockSpec(memory_space=pltpu.MemorySpace.VMEM),
        )(x)
        # np.roll convention: result[1] == x[0] == 0  ->  sign = +1.
        _ROLL_SIGN = 1 if int(out[1, 0]) == 0 else -1
    return _ROLL_SIGN


# ------------------------------ in-kernel helpers -----------------------------


def _zero_halo(pad_ref, h, w):
    """Zero the halo of a padded activation scratch (rows 0 / h+1, cols [w, w+8)).

    All three stores are full-sublane-tile aligned (w is a multiple of 8)."""
    hp, n, wp, c = pad_ref.shape
    zrow = jnp.zeros((1, n, wp, c), pad_ref.dtype)
    pad_ref[0:1, :, :, :] = zrow
    pad_ref[hp - 1:hp, :, :, :] = zrow
    pad_ref[:, :, w:wp, :] = jnp.zeros((hp, n, wp - w, c), pad_ref.dtype)


def _conv3x3(src_ref, w_ref, h, w, roll_sign, bias=None):
    """3x3 'same' conv as 9 sublane-aligned tap matmuls (bf16 MXU, f32 acc).

    src_ref: (h+2, n, w+8, cin) f32; image at [1:h+1, :, 0:w, :], halo zero.
    w_ref:   (9, cin, cout) bf16, tap index t = ky*3 + kx.
    returns: (h*n*w, cout) f32, rows ordered (h, n, w).
    """
    _, n, wpad, cin = src_ref.shape
    m = h * n * w
    base = src_ref[...]
    acc = None
    # kx = 0/1/2 needs image column wo-1 / wo / wo+1.  Rolling the whole padded
    # buffer on the W (sublane) axis keeps every tap read aligned at offset 0;
    # the cyclic wrap for the borders lands in the zeroed [w, w+8) halo strip.
    for kx in range(3):
        amt = (roll_sign * (1 - kx)) % wpad
        shifted = base if amt == 0 else pltpu.roll(base, amt, axis=2)
        shifted = shifted.astype(jnp.bfloat16)        # bf16 MXU operands
        for ky in range(3):
            tap = shifted[ky:ky + h, :, 0:w, :].reshape(m, cin)
            part = jnp.dot(tap, w_ref[ky * 3 + kx],
                           preferred_element_type=jnp.float32)
            acc = part if acc is None else acc + part
    return acc if bias is None else acc + bias


def _bn_relu(y, count, gamma, beta):
    """Training-mode BatchNorm (batch stats, biased var, eps=1e-5) + ReLU on (M, C)."""
    inv = 1.0 / count
    mean = jnp.sum(y, axis=0, keepdims=True) * inv
    var = jnp.sum(y * y, axis=0, keepdims=True) * inv - mean * mean
    var = jnp.maximum(var, 0.0)                       # guard one-pass cancellation
    scale = gamma * jax.lax.rsqrt(var + BN_EPS)
    shift = beta - mean * scale
    return jnp.maximum(y * scale + shift, 0.0)


def _store_interior(pad_ref, x4):
    """Write x4 = (h, n, w, c) to pad_ref[1:h+1, :, 0:w, :] (aligned, unmasked)."""
    h, _, w, _ = x4.shape
    pad_ref[1:h + 1, :, 0:w, :] = x4


def _maxpool2x2(x4, st_ref):
    """2x2 / stride-2 max pool of x4 = (h, n, w, c) -> (h//2, n, w//2, c)."""
    h, n, w, c = x4.shape
    t = x4.reshape(h // 2, 2 * n, w, c)               # leading-dim regroup (free)
    hpooled = jnp.maximum(t[:, 0:n, :, :], t[:, n:2 * n, :, :])
    st_ref[...] = hpooled                             # stage for strided W reads
    a = st_ref[:, :, pl.ds(0, w // 2, stride=2), :]
    b = st_ref[:, :, pl.ds(1, w // 2, stride=2), :]
    return jnp.maximum(a, b)


def _fc_softmax(p4, fcw_ref, fcb_ref, logits_ref, probs_ref):
    """fc + softmax.  PyTorch's NCHW flatten order is folded into fcw on the host."""
    t = p4 * fcw_ref[...]                             # (hf, n, wf, c) * (hf, 1, wf, c)
    s = jnp.sum(jnp.sum(t, axis=0), axis=1)           # (n, c)
    z = jnp.sum(s, axis=1, keepdims=True) + fcb_ref[...]
    logits_ref[...] = z
    zmax = jnp.max(z, axis=1, keepdims=True)
    e = jnp.exp(z - zmax)
    probs_ref[...] = e / jnp.sum(e, axis=1, keepdims=True)


# ------------------------------ fused kernel ----------------------------------


def cnn4b_kernel(x_ref,
                 w0_ref, g0_ref, be0_ref,
                 w1_ref, g1_ref, be1_ref,
                 w2_ref, b2_ref,
                 w3_ref, b3_ref,
                 w4_ref, b4_ref,
                 fcw_ref, fcb_ref,
                 logits_ref, probs_ref,
                 pad1, pad2, pad3, pad4, st1, st2, st3, st4,
                 *, roll_sign):
    hp, n, wp, _ = x_ref.shape
    h, w = hp - 2, wp - _W_HALO

    _zero_halo(pad1, h, w)
    _zero_halo(pad2, h // 2, w // 2)
    _zero_halo(pad3, h // 4, w // 4)
    _zero_halo(pad4, h // 8, w // 8)

    # conv0 + bn0 + relu (3 -> 3, 64x64).  Conv bias omitted: it cancels exactly
    # against the batch-mean subtraction of the training-mode BatchNorm.
    y = _conv3x3(x_ref, w0_ref, h, w, roll_sign)
    y = _bn_relu(y, float(h * n * w), g0_ref[...], be0_ref[...])
    _store_interior(pad1, y.reshape(h, n, w, -1))

    # conv1 + bn1 + relu + pool (3 -> 10, 64x64 -> 32x32).  Bias omitted (BN).
    y = _conv3x3(pad1, w1_ref, h, w, roll_sign)
    y = _bn_relu(y, float(h * n * w), g1_ref[...], be1_ref[...])
    p = _maxpool2x2(y.reshape(h, n, w, -1), st1)
    _store_interior(pad2, p)

    # conv2 + relu + pool (10 -> 20, 32x32 -> 16x16)
    h, w = h // 2, w // 2
    y = jnp.maximum(_conv3x3(pad2, w2_ref, h, w, roll_sign, bias=b2_ref[...]), 0.0)
    p = _maxpool2x2(y.reshape(h, n, w, -1), st2)
    _store_interior(pad3, p)

    # conv3 + relu + pool (20 -> 40, 16x16 -> 8x8)
    h, w = h // 2, w // 2
    y = jnp.maximum(_conv3x3(pad3, w3_ref, h, w, roll_sign, bias=b3_ref[...]), 0.0)
    p = _maxpool2x2(y.reshape(h, n, w, -1), st3)
    _store_interior(pad4, p)

    # conv4 + relu + pool (40 -> 80, 8x8 -> 4x4)
    h, w = h // 2, w // 2
    y = jnp.maximum(_conv3x3(pad4, w4_ref, h, w, roll_sign, bias=b4_ref[...]), 0.0)
    p = _maxpool2x2(y.reshape(h, n, w, -1), st4)      # (4, n, 4, 80)

    # flatten (NCHW order folded into fcw on the host) + fc + softmax
    _fc_softmax(p, fcw_ref, fcb_ref, logits_ref, probs_ref)


# --------------------------------- wrapper ------------------------------------


def _vmem_spec():
    return pl.BlockSpec(memory_space=pltpu.MemorySpace.VMEM)


@functools.partial(jax.jit, static_argnums=(2,))
def _cnn4b_forward_impl(x_nchw, params, roll_sign):
    x = x_nchw.astype(jnp.float32)
    n, _, h, w = x.shape
    # NCHW -> (H, N, W, C); H padded by 1 on each side, W padded by one full
    # sublane tile on the right only (image at W offset 0 => every bulk store
    # and tap read is sublane-aligned; the left conv border is reached through
    # the cyclic roll wrap into the zeroed [w, w+8) halo columns).
    xh = jnp.transpose(x, (2, 0, 3, 1))
    xp = jnp.pad(xh, ((1, 1), (0, 0), (0, _W_HALO), (0, 0)))

    c0 = params["conv0_w"].shape[-1]
    c1 = params["conv1_w"].shape[-1]
    c2 = params["conv2_w"].shape[-1]
    c3 = params["conv3_w"].shape[-1]
    c4 = params["conv4_w"].shape[-1]

    h1, w1 = h // 2, w // 2
    h2, w2 = h1 // 2, w1 // 2
    h3, w3 = h2 // 2, w2 // 2
    h4, w4 = h3 // 2, w3 // 2
    assert params["fc_w"].shape[0] == c4 * h4 * w4, "fc expects a 64x64 input"

    # Fold PyTorch's (N, C*H*W) flatten order into the fc weight layout (Hf,1,Wf,C).
    fcw = params["fc_w"].reshape(c4, h4, w4)
    fcw = jnp.transpose(fcw, (1, 2, 0))[:, None, :, :]

    bf16 = jnp.bfloat16
    args = (xp,
            params["conv0_w"].astype(bf16), params["bn0_g"], params["bn0_b"],
            params["conv1_w"].astype(bf16), params["bn1_g"], params["bn1_b"],
            params["conv2_w"].astype(bf16), params["conv2_b"],
            params["conv3_w"].astype(bf16), params["conv3_b"],
            params["conv4_w"].astype(bf16), params["conv4_b"],
            fcw, params["fc_b"])

    scratch = [
        pltpu.VMEM((h + 2, n, w + _W_HALO, c0), jnp.float32),    # pad1: conv1 input
        pltpu.VMEM((h1 + 2, n, w1 + _W_HALO, c1), jnp.float32),  # pad2: conv2 input
        pltpu.VMEM((h2 + 2, n, w2 + _W_HALO, c2), jnp.float32),  # pad3: conv3 input
        pltpu.VMEM((h3 + 2, n, w3 + _W_HALO, c3), jnp.float32),  # pad4: conv4 input
        pltpu.VMEM((h1, n, w, c1), jnp.float32),                 # st1: pool staging
        pltpu.VMEM((h2, n, w1, c2), jnp.float32),                # st2
        pltpu.VMEM((h3, n, w2, c3), jnp.float32),                # st3
        pltpu.VMEM((h4, n, w3, c4), jnp.float32),                # st4
    ]

    kernel = functools.partial(cnn4b_kernel, roll_sign=roll_sign)
    logits, probs = pl.pallas_call(
        kernel,
        out_shape=(jax.ShapeDtypeStruct((n, 1), jnp.float32),
                   jax.ShapeDtypeStruct((n, 1), jnp.float32)),
        in_specs=[_vmem_spec() for _ in args],
        out_specs=(_vmem_spec(), _vmem_spec()),
        scratch_shapes=scratch,
        compiler_params=pltpu.CompilerParams(
            # Derivation at N=2: inputs + outputs + declared scratch (128-lane
            # padded) ~14 MiB; peak value temporaries during conv0/conv1 (f32
            # padded base + one rolled copy + bf16 cast + f32 accumulator)
            # ~20-24 MiB.  48 MiB keeps margin, still fits v7x's 64 MiB physical
            # VMEM, and is generous on v5e/v6e (128 MiB).
            vmem_limit_bytes=48 * 1024 * 1024),
    )(*args)
    return logits, probs


def cnn4b_forward(x_nchw, params):
    return _cnn4b_forward_impl(x_nchw, params, _roll_sign())


# ------------------------------ params / demo ---------------------------------

_CONV_DIMS = [(3, 3), (3, 10), (10, 20), (20, 40), (40, 80)]


def init_params(key):
    params = {}
    keys = jax.random.split(key, 2 * len(_CONV_DIMS) + 2)
    for i, (cin, cout) in enumerate(_CONV_DIMS):
        bound = 1.0 / (cin * 9) ** 0.5                # PyTorch Conv2d default-style bound
        params[f"conv{i}_w"] = jax.random.uniform(
            keys[2 * i], (9, cin, cout), jnp.float32, -bound, bound)
        # conv0_b / conv1_b are kept for interface fidelity with the module but
        # are not used by the kernel (exact no-op before training-mode BN).
        params[f"conv{i}_b"] = jax.random.uniform(
            keys[2 * i + 1], (1, cout), jnp.float32, -bound, bound)
    params["bn0_g"] = jnp.ones((1, 3), jnp.float32)
    params["bn0_b"] = jnp.zeros((1, 3), jnp.float32)
    params["bn1_g"] = jnp.ones((1, 10), jnp.float32)
    params["bn1_b"] = jnp.zeros((1, 10), jnp.float32)
    fin = 4 * 4 * 80                                  # 2 * 2 * 320 = 1280 in the module
    fb = 1.0 / fin ** 0.5
    params["fc_w"] = jax.random.uniform(keys[-2], (fin, 1), jnp.float32, -fb, fb)
    params["fc_b"] = jax.random.uniform(keys[-1], (1, 1), jnp.float32, -fb, fb)
    return params


if __name__ == "__main__":
    key = jax.random.PRNGKey(0)
    pkey, xkey = jax.random.split(key)
    params = init_params(pkey)
    # fc expects 2*2*320 = 1280 = 80*4*4 features -> 64x64 input (four 2x2 pools);
    # batch kept small at 2.
    x = jax.random.normal(xkey, (2, 3, 64, 64), jnp.float32)
    logits, probs = cnn4b_forward(x, params)
    jax.block_until_ready((logits, probs))
    assert logits.shape == (2, 1) and probs.shape == (2, 1)
    print("KERNEL_OK")
</pallas_src>

<mosaic_0001>
module attributes {stable_mosaic.version = 11 : i64} {
  func.func @probe(%arg0: memref<8x128xf32, #tpu.memory_space<vmem>>, %arg1: memref<8x128xf32, #tpu.memory_space<vmem>>) attributes {dimension_semantics = [], scalar_prefetch = 0 : i64, scratch_operands = 0 : i64, tpu.core_type = #tpu.core_type<tc>} {
    %c0 = arith.constant 0 : index
    %c0_0 = arith.constant 0 : index
    %0 = vector.load %arg0[%c0, %c0_0] : memref<8x128xf32, #tpu.memory_space<vmem>>, vector<8x128xf32>
    %c1_i32 = arith.constant 1 : i32
    %1 = tpu.dynamic_rotate %0 by %c1_i32 dim 0 : vector<8x128xf32>, i32 -> vector<8x128xf32>
    %c0_1 = arith.constant 0 : index
    %c0_2 = arith.constant 0 : index
    %2 = vector.load %arg1[%c0_1, %c0_2] : memref<8x128xf32, #tpu.memory_space<vmem>>, vector<8x128xf32>
    tpu.vector_store %arg1[%c0_1, %c0_2], %1 {strides = array<i32>} : memref<8x128xf32, #tpu.memory_space<vmem>>, vector<8x128xf32>,
    return
  }
}

</mosaic_0001>

<llo_original>
// kernel: tpu_custom_call.1
$region0: #{tpu_custom_call.1}
  #allocation0 [shape = 'u32[]', space=smem, size = 0x4, offset = 0x4, fixed_abs, tag = 'smem constant byte address 0x4 - core index']
  #allocation1 [shape = 'u32[144,128]{1,0:T(1,128)}', space=vmem, size = 0x12000, scoped, tag = 'internal scratch']
  %s0 = inlined_call_operand.hbm [shape: f32[8,128], index: 0, kind: input, shape index: {}]
  %s1 = inlined_call_operand.hbm [shape: f32[8,128], index: 1, kind: output, shape index: {}]
  %s2 = sld [smem:[#allocation0]]
  $region18: #{tpu_custom_call.1} parent=0
    _
  %s4 = ssub.s32 1, %s2
  %s5 = scalar_select 0, %s4, %s2
  $region1: #{tpu_custom_call.1} parent=0
    #allocation2 [shape = 'u8[4096]{0}', space=vmem, size = 0x1000, scoped, tag = 'input window, operand 0, single buffered']
    #allocation3 [shape = 's32[1]{0}', space=sflag, size = 0x4, scoped, tag = 'scoped memory for tpu_custom_call.1']
    #allocation4 [shape = 's32[1]{0}', space=sflag, size = 0x4, scoped, tag = 'scoped memory for tpu_custom_call.1']
    #allocation5 [shape = 'u8[4096]{0}', space=vmem, size = 0x1000, scoped, tag = 'output window, operand 0, single buffered']
    %6 = vsyncpa [#allocation3], 0
    %7 = vsyncpa [#allocation4], 0
    // Predicated region
    $region2: #{tpu_custom_call.1} parent=1 // pred_check
      _
    $region3: #{tpu_custom_call.1} parent=1 // pred_check_branch
      %9 = sbr.rel (0) target = $region5
    $region4: #{tpu_custom_call.1} parent=1 // pred_region
      %s11 = ssub.s32 128, 128
      %12 = vsyncadd [#allocation3], %s11
      %s14 = sshll.u32 [#allocation2], 4
      %s15 = int_to_ptr.vmem [resolvable:$true] %s14
      %17 = dma.hbm_to_vmem [thread:$0]  %s0, 128, %s15, [#allocation3]
    $region5: #{tpu_custom_call.1} parent=1 // pred_fallthru
      _
    // Predicated region
    $region6: #{tpu_custom_call.1} parent=1 // pred_check
      _
    $region7: #{tpu_custom_call.1} parent=1 // pred_check_branch
      %19 = sbr.rel (0) target = $region9
    $region8: #{tpu_custom_call.1} parent=1 // pred_region
      %20 = dma.done [#allocation3], 128
    $region9: #{tpu_custom_call.1} parent=1 // pred_fallthru
      _
    %v21 = vld [vmem:[#allocation2] sm:$0xff]
    %v22 = vrot.slane %v21, 7
    %23 = vst [vmem:[#allocation5] sm:$0xff] %v22
    // Predicated region
    $region10: #{tpu_custom_call.1} parent=1 // pred_check
      _
    $region11: #{tpu_custom_call.1} parent=1 // pred_check_branch
      %25 = sbr.rel (0) target = $region13
    $region12: #{tpu_custom_call.1} parent=1 // pred_region
      %s27 = ssub.s32 128, 128
      %28 = vsyncadd [#allocation4], %s27
      %s30 = sshll.u32 [#allocation5], 4
      %s31 = int_to_ptr.vmem [resolvable:$true] %s30
      %33 = dma.vmem_to_hbm [thread:$0]  %s31, 128, %s1, [#allocation4]
    $region13: #{tpu_custom_call.1} parent=1 // pred_fallthru
      _
    // Predicated region
    $region14: #{tpu_custom_call.1} parent=1 // pred_check
      _
    $region15: #{tpu_custom_call.1} parent=1 // pred_check_branch
      %35 = sbr.rel (0) target = $region17
    $region16: #{tpu_custom_call.1} parent=1 // pred_region
      %36 = dma.done [#allocation4], 128
    $region17: #{tpu_custom_call.1} parent=1 // pred_fallthru
      _
    %37 = vsyncpa [#allocation3], 1
    %38 = vsyncpa [#allocation4], 1

</llo_original>
